<compile_context>
chip_gen: v5e
topology: v5e:2x2
jax: 0.10.0
libtpu: 0.0.40
codegen_flags: <defaults>
</compile_context>

<pallas_src>
import numpy as np
import jax
import jax.numpy as jnp
from jax.experimental import pallas as pl
from jax.experimental.pallas import tpu as pltpu

N_QUBITS = 6
N_LAYERS = 8
DIM = 2 ** N_QUBITS      # 64
OUT_PAD = 8              # output lane width written to HBM (real outputs are [:, :4])


# ----------------------------- Pallas kernel --------------------------------
def quantum_dnn_kernel(x_ref, wpre_ref, bpre_ref, bits_ref, uri_ref,
                       zw1_ref, b1_ref, w2_ref, b2_ref, out_ref):
    x = x_ref[...]                                                      # (TB, 3)

    # preprocess Linear(3 -> 6); the 0.5 half-angle factor is folded into wpre/bpre.
    half = jnp.dot(x, wpre_ref[...],
                   preferred_element_type=jnp.float32) + bpre_ref[...]  # (TB, 6)
    c = jnp.cos(half)
    s = jnp.sin(half)
    d = s - c

    # AngleEmbedding(RX) product-state magnitudes over the 64 basis states:
    # factor_i(b) = cos(a_i/2) if bit_i(b)==0 else sin(a_i/2).
    # One multiply-add per qubit, combined as a balanced tree (dep chain 3, not 6).
    bits = bits_ref[...]                                                # (6, 64)
    f = [c[:, i:i + 1] + d[:, i:i + 1] * bits[i:i + 1, :]
         for i in range(N_QUBITS)]                                      # each (TB, 64)
    mag = (f[0] * f[1]) * (f[2] * f[3]) * (f[4] * f[5])                 # (TB, 64)

    # entangling-circuit unitary, [Re | Im] concatenated -> one lane-dense matmul.
    # Kept in f32: this output is squared, so bf16 operands would eat the accuracy budget.
    state = jnp.dot(mag, uri_ref[...],
                    preferred_element_type=jnp.float32)                 # (TB, 128)
    sq = state * state                                                  # Re^2 | Im^2

    # probs -> <Z_i> -> Linear(6->64) all folded into one (128,64) matmul (bf16 operands,
    # f32 accumulate), then Tanh in f32.
    h = jnp.tanh(jnp.dot(sq.astype(jnp.bfloat16), zw1_ref[...],
                         preferred_element_type=jnp.float32) + b1_ref[...])   # (TB, 64)

    # Linear(64 -> 4), padded to 8 output lanes (bf16 operands, f32 accumulate);
    # wrapper slices [:, :4] of the narrow (B, 8) result.
    out_ref[...] = jnp.dot(h.astype(jnp.bfloat16), w2_ref[...],
                           preferred_element_type=jnp.float32) + b2_ref[...]  # (TB, 8)


def quantum_dnn_forward(x, params, tile_b=2048):
    B = x.shape[0]
    tb = min(tile_b, B)
    if B >= 16:
        # ensure the grid has >= 2 steps so v7x's two TensorCores both get work
        half_b = ((pl.cdiv(B, 2) + 7) // 8) * 8
        tb = min(tb, half_b)
    if tb < B:
        tb = max(8, (tb // 8) * 8)        # tiled case: tile must be a multiple of 8 sublanes
    grid = (pl.cdiv(B, tb),)

    args = (x, params["wpre_half"], params["bpre_half"], params["bits"],
            params["uri"], params["zw1"], params["b1"],
            params["w2_pad"], params["b2_pad"])

    const = lambda i: (0, 0)              # weights: same block every step -> stay resident
    in_specs = [pl.BlockSpec((tb, 3), lambda i: (i, 0))] + \
               [pl.BlockSpec(a.shape, const) for a in args[1:]]
    out_spec = pl.BlockSpec((tb, OUT_PAD), lambda i: (i, 0))

    weight_bytes = int(sum(a.size * a.dtype.itemsize for a in args[1:]))
    cost = pl.CostEstimate(
        flops=int(2 * B * (3 * N_QUBITS + DIM * 2 * DIM + 2 * DIM * DIM + DIM * OUT_PAD)
                  + 12 * B * DIM),
        transcendentals=int(B * (2 * N_QUBITS + DIM)),
        bytes_accessed=int(4 * B * (3 + OUT_PAD) + weight_bytes),
    )

    # Explicit scoped-VMEM limit so large batch tiles land on v5e's 16 MiB default while
    # staying under v7x's 64 MiB physical VMEM (per-tile footprint is ~12 f32 (tb,128) slabs
    # plus resident weights; double it for compiler headroom).
    est_tile_bytes = 4 * tb * 128 * 12 + 2 * weight_bytes
    vmem_limit = int(min(56 * 1024 * 1024, max(32 * 1024 * 1024, 2 * est_tile_bytes)))

    out8 = pl.pallas_call(
        quantum_dnn_kernel,
        out_shape=jax.ShapeDtypeStruct((B, OUT_PAD), jnp.float32),
        grid=grid,
        in_specs=in_specs,
        out_specs=out_spec,
        compiler_params=pltpu.CompilerParams(
            dimension_semantics=("parallel",),
            vmem_limit_bytes=vmem_limit),
        cost_estimate=cost,
    )(*args)
    return out8[:, :4]


# ----------------------- setup-time circuit construction --------------------
def _rot(phi, theta, omega):
    # qml.Rot = RZ(omega) RY(theta) RZ(phi)
    c, s = np.cos(theta / 2.0), np.sin(theta / 2.0)
    return np.array(
        [[np.exp(-0.5j * (phi + omega)) * c, -np.exp(0.5j * (phi - omega)) * s],
         [np.exp(0.5j * (omega - phi)) * s,   np.exp(0.5j * (phi + omega)) * c]],
        dtype=np.complex128)


def _apply_1q(U, gate, wire):
    U = U.reshape((2,) * N_QUBITS + (DIM,))
    U = np.tensordot(gate, U, axes=([1], [wire]))
    U = np.moveaxis(U, 0, wire)
    return U.reshape(DIM, DIM)


def _apply_cnot(U, control, target):
    U = U.reshape((2,) * N_QUBITS + (DIM,)).copy()
    i0 = [slice(None)] * (N_QUBITS + 1)
    i1 = [slice(None)] * (N_QUBITS + 1)
    i0[control], i0[target] = 1, 0
    i1[control], i1[target] = 1, 1
    tmp = U[tuple(i0)].copy()
    U[tuple(i0)] = U[tuple(i1)]
    U[tuple(i1)] = tmp
    return U.reshape(DIM, DIM)


def build_entangling_unitary(q_weights):
    """8 consecutive StronglyEntanglingLayers blocks, each with N_LAYERS layers."""
    U = np.eye(DIM, dtype=np.complex128)
    for w in q_weights:                                  # shape (N_LAYERS, N_QUBITS, 3)
        for l in range(N_LAYERS):
            for q in range(N_QUBITS):
                U = _apply_1q(U, _rot(*w[l, q]), q)
            r = (l % (N_QUBITS - 1)) + 1                 # default imprimitive range
            for q in range(N_QUBITS):
                U = _apply_cnot(U, q, (q + r) % N_QUBITS)
    return U


def make_params(seed=0):
    rng = np.random.RandomState(seed)
    # classical preprocess Linear(3 -> 6)
    wpre = rng.uniform(-1, 1, (3, N_QUBITS)) / np.sqrt(3.0)
    bpre = rng.uniform(-1, 1, (1, N_QUBITS)) / np.sqrt(3.0)
    # quantum weights: ParameterList of 8 tensors (n_layers, n_qubits, 3)
    q_weights = [0.01 * rng.randn(N_LAYERS, N_QUBITS, 3) for _ in range(N_LAYERS)]
    # classical postprocess Linear(6 -> 64) -> Tanh -> Linear(64 -> 4)
    w1 = rng.uniform(-1, 1, (N_QUBITS, 64)) / np.sqrt(float(N_QUBITS))
    b1 = rng.uniform(-1, 1, (1, 64)) / np.sqrt(float(N_QUBITS))
    w2 = rng.uniform(-1, 1, (64, 4)) / np.sqrt(64.0)
    b2 = rng.uniform(-1, 1, (1, 4)) / np.sqrt(64.0)

    U = build_entangling_unitary(q_weights)

    basis = np.arange(DIM)
    bits = np.stack([(basis >> (N_QUBITS - 1 - i)) & 1
                     for i in range(N_QUBITS)], axis=0).astype(np.float64)  # wire 0 = MSB
    popcount = bits.sum(axis=0)
    phase = (-1j) ** popcount                            # RX embedding phase
    u_eff = U * phase[None, :]                           # fold phase into columns
    zsign = (1.0 - 2.0 * bits).T                         # (64, 6): +1/-1

    # --- setup-time algebraic folds for the kernel ---
    uri = np.concatenate([u_eff.real.T, u_eff.imag.T], axis=1)   # (64, 128): mag @ [ReT|ImT]
    zw1 = zsign @ w1                                             # (64, 64)
    zw1_2 = np.vstack([zw1, zw1])                                # (128, 64): acts on [Re^2|Im^2]
    w2_pad = np.zeros((64, OUT_PAD)); w2_pad[:, :4] = w2
    b2_pad = np.zeros((1, OUT_PAD)); b2_pad[:, :4] = b2

    f32 = lambda a: jnp.asarray(a, jnp.float32)
    bf16 = lambda a: jnp.asarray(a, jnp.bfloat16)
    kernel_params = dict(
        wpre_half=f32(0.5 * wpre), bpre_half=f32(0.5 * bpre), bits=f32(bits),
        uri=f32(uri),                       # f32: feeds the squared quantum state
        zw1=bf16(zw1_2), b1=f32(b1),        # bf16 operands, f32 accumulate + bias
        w2_pad=bf16(w2_pad), b2_pad=f32(b2_pad),
    )
    ref_params = dict(wpre=wpre, bpre=bpre, U=U, zsign=zsign,
                      w1=w1, b1=b1, w2=w2, b2=b2)
    return kernel_params, ref_params


def reference_forward(x_np, ref):
    """float64 numpy reference of the un-folded forward pass (for validation)."""
    angles = x_np @ ref["wpre"] + ref["bpre"]                     # (B, 6)
    c, s = np.cos(angles / 2.0), np.sin(angles / 2.0)
    psi = np.ones((x_np.shape[0], 1), np.complex128)
    for i in range(N_QUBITS):                                     # RX product state, wire0=MSB
        amp = np.stack([c[:, i], -1j * s[:, i]], axis=-1)         # (B, 2)
        psi = (psi[:, :, None] * amp[:, None, :]).reshape(x_np.shape[0], -1)
    psi = psi @ ref["U"].T
    probs = np.abs(psi) ** 2
    z = probs @ ref["zsign"]
    h = np.tanh(z @ ref["w1"] + ref["b1"])
    return h @ ref["w2"] + ref["b2"]


if __name__ == "__main__":
    params, ref = make_params(0)

    # single-tile path (grid of 1)
    x = jax.random.normal(jax.random.PRNGKey(0), (8, 3), dtype=jnp.float32)
    out = jax.block_until_ready(quantum_dnn_forward(x, params))
    assert out.shape == (8, 4) and out.dtype == jnp.float32
    expected = reference_forward(np.asarray(x, np.float64), ref)
    # 5e-3 tolerance: bf16 operands on the two post-circuit matmuls (f32 accumulation)
    # vs. the float64 reference.
    np.testing.assert_allclose(np.asarray(out), expected, rtol=5e-3, atol=5e-3)

    # tiled path (grid of 2, last tile partial) to exercise the batch-sharded grid
    x2 = jax.random.normal(jax.random.PRNGKey(1), (24, 3), dtype=jnp.float32)
    out2 = jax.block_until_ready(quantum_dnn_forward(x2, params))
    assert out2.shape == (24, 4)
    expected2 = reference_forward(np.asarray(x2, np.float64), ref)
    np.testing.assert_allclose(np.asarray(out2), expected2, rtol=5e-3, atol=5e-3)

    print("KERNEL_OK")
</pallas_src>

<mosaic_0001>
module attributes {stable_mosaic.version = 11 : i64} {
  func.func @quantum_dnn_kernel(%arg0: i32, %arg1: memref<8x3xf32, #tpu.memory_space<vmem>>, %arg2: memref<3x6xf32, #tpu.memory_space<vmem>>, %arg3: memref<1x6xf32, #tpu.memory_space<vmem>>, %arg4: memref<6x64xf32, #tpu.memory_space<vmem>>, %arg5: memref<64x128xf32, #tpu.memory_space<vmem>>, %arg6: memref<128x64xbf16, #tpu.memory_space<vmem>>, %arg7: memref<1x64xf32, #tpu.memory_space<vmem>>, %arg8: memref<64x8xbf16, #tpu.memory_space<vmem>>, %arg9: memref<1x8xf32, #tpu.memory_space<vmem>>, %arg10: memref<8x8xf32, #tpu.memory_space<vmem>>) attributes {dimension_semantics = [#tpu.dimension_semantics<parallel>], iteration_bounds = array<i64: 1>, scalar_prefetch = 0 : i64, scratch_operands = 0 : i64, tpu.core_type = #tpu.core_type<tc>, window_params = [{transform_indices = @transform_0, window_bounds = array<i64: 8, 3>}, {pipeline_mode = #tpu.pipeline_mode<synchronous>, transform_indices = @transform_1, window_bounds = array<i64: 3, 6>}, {pipeline_mode = #tpu.pipeline_mode<synchronous>, transform_indices = @transform_2, window_bounds = array<i64: 1, 6>}, {pipeline_mode = #tpu.pipeline_mode<synchronous>, transform_indices = @transform_3, window_bounds = array<i64: 6, 64>}, {pipeline_mode = #tpu.pipeline_mode<synchronous>, transform_indices = @transform_4, window_bounds = array<i64: 64, 128>}, {pipeline_mode = #tpu.pipeline_mode<synchronous>, transform_indices = @transform_5, window_bounds = array<i64: 128, 64>}, {pipeline_mode = #tpu.pipeline_mode<synchronous>, transform_indices = @transform_6, window_bounds = array<i64: 1, 64>}, {pipeline_mode = #tpu.pipeline_mode<synchronous>, transform_indices = @transform_7, window_bounds = array<i64: 64, 8>}, {pipeline_mode = #tpu.pipeline_mode<synchronous>, transform_indices = @transform_8, window_bounds = array<i64: 1, 8>}, {transform_indices = @transform_9, window_bounds = array<i64: 8, 8>}]} {
    %c0 = arith.constant 0 : index
    %c0_0 = arith.constant 0 : index
    %0 = vector.load %arg1[%c0, %c0_0] : memref<8x3xf32, #tpu.memory_space<vmem>>, vector<8x3xf32>
    %c0_1 = arith.constant 0 : index
    %c0_2 = arith.constant 0 : index
    %1 = vector.load %arg2[%c0_1, %c0_2] : memref<3x6xf32, #tpu.memory_space<vmem>>, vector<3x6xf32>
    %cst = arith.constant dense<0.000000e+00> : vector<8x6xf32>
    %2 = tpu.matmul %0, %1, %cst {dimension_numbers = #tpu.dot_dimension_numbers<[1], [0], [0], [1], [0, 0, 1, 1], [], []>} : vector<8x3xf32>, vector<3x6xf32>, vector<8x6xf32> -> vector<8x6xf32>
    %c0_3 = arith.constant 0 : index
    %c0_4 = arith.constant 0 : index
    %3 = vector.load %arg3[%c0_3, %c0_4] : memref<1x6xf32, #tpu.memory_space<vmem>>, vector<1x6xf32>
    %4 = vector.broadcast %3 : vector<1x6xf32> to vector<8x6xf32>
    %5 = arith.addf %2, %4 : vector<8x6xf32>
    %6 = math.cos %5 : vector<8x6xf32>
    %7 = math.sin %5 : vector<8x6xf32>
    %8 = arith.subf %7, %6 : vector<8x6xf32>
    %c0_5 = arith.constant 0 : index
    %c0_6 = arith.constant 0 : index
    %9 = vector.load %arg4[%c0_5, %c0_6] : memref<6x64xf32, #tpu.memory_space<vmem>>, vector<6x64xf32>
    %10 = vector.extract_strided_slice %6 {offsets = [0, 0], sizes = [8, 1], strides = [1, 1]} : vector<8x6xf32> to vector<8x1xf32>
    %11 = vector.extract_strided_slice %8 {offsets = [0, 0], sizes = [8, 1], strides = [1, 1]} : vector<8x6xf32> to vector<8x1xf32>
    %12 = vector.extract_strided_slice %9 {offsets = [0, 0], sizes = [1, 64], strides = [1, 1]} : vector<6x64xf32> to vector<1x64xf32>
    %13 = vector.broadcast %11 : vector<8x1xf32> to vector<8x64xf32>
    %14 = vector.broadcast %12 : vector<1x64xf32> to vector<8x64xf32>
    %15 = arith.mulf %13, %14 : vector<8x64xf32>
    %16 = vector.broadcast %10 : vector<8x1xf32> to vector<8x64xf32>
    %17 = arith.addf %16, %15 : vector<8x64xf32>
    %18 = vector.extract_strided_slice %6 {offsets = [0, 1], sizes = [8, 1], strides = [1, 1]} : vector<8x6xf32> to vector<8x1xf32>
    %19 = vector.extract_strided_slice %8 {offsets = [0, 1], sizes = [8, 1], strides = [1, 1]} : vector<8x6xf32> to vector<8x1xf32>
    %20 = vector.extract_strided_slice %9 {offsets = [1, 0], sizes = [1, 64], strides = [1, 1]} : vector<6x64xf32> to vector<1x64xf32>
    %21 = vector.broadcast %19 : vector<8x1xf32> to vector<8x64xf32>
    %22 = vector.broadcast %20 : vector<1x64xf32> to vector<8x64xf32>
    %23 = arith.mulf %21, %22 : vector<8x64xf32>
    %24 = vector.broadcast %18 : vector<8x1xf32> to vector<8x64xf32>
    %25 = arith.addf %24, %23 : vector<8x64xf32>
    %26 = vector.extract_strided_slice %6 {offsets = [0, 2], sizes = [8, 1], strides = [1, 1]} : vector<8x6xf32> to vector<8x1xf32>
    %27 = vector.extract_strided_slice %8 {offsets = [0, 2], sizes = [8, 1], strides = [1, 1]} : vector<8x6xf32> to vector<8x1xf32>
    %28 = vector.extract_strided_slice %9 {offsets = [2, 0], sizes = [1, 64], strides = [1, 1]} : vector<6x64xf32> to vector<1x64xf32>
    %29 = vector.broadcast %27 : vector<8x1xf32> to vector<8x64xf32>
    %30 = vector.broadcast %28 : vector<1x64xf32> to vector<8x64xf32>
    %31 = arith.mulf %29, %30 : vector<8x64xf32>
    %32 = vector.broadcast %26 : vector<8x1xf32> to vector<8x64xf32>
    %33 = arith.addf %32, %31 : vector<8x64xf32>
    %34 = vector.extract_strided_slice %6 {offsets = [0, 3], sizes = [8, 1], strides = [1, 1]} : vector<8x6xf32> to vector<8x1xf32>
    %35 = vector.extract_strided_slice %8 {offsets = [0, 3], sizes = [8, 1], strides = [1, 1]} : vector<8x6xf32> to vector<8x1xf32>
    %36 = vector.extract_strided_slice %9 {offsets = [3, 0], sizes = [1, 64], strides = [1, 1]} : vector<6x64xf32> to vector<1x64xf32>
    %37 = vector.broadcast %35 : vector<8x1xf32> to vector<8x64xf32>
    %38 = vector.broadcast %36 : vector<1x64xf32> to vector<8x64xf32>
    %39 = arith.mulf %37, %38 : vector<8x64xf32>
    %40 = vector.broadcast %34 : vector<8x1xf32> to vector<8x64xf32>
    %41 = arith.addf %40, %39 : vector<8x64xf32>
    %42 = vector.extract_strided_slice %6 {offsets = [0, 4], sizes = [8, 1], strides = [1, 1]} : vector<8x6xf32> to vector<8x1xf32>
    %43 = vector.extract_strided_slice %8 {offsets = [0, 4], sizes = [8, 1], strides = [1, 1]} : vector<8x6xf32> to vector<8x1xf32>
    %44 = vector.extract_strided_slice %9 {offsets = [4, 0], sizes = [1, 64], strides = [1, 1]} : vector<6x64xf32> to vector<1x64xf32>
    %45 = vector.broadcast %43 : vector<8x1xf32> to vector<8x64xf32>
    %46 = vector.broadcast %44 : vector<1x64xf32> to vector<8x64xf32>
    %47 = arith.mulf %45, %46 : vector<8x64xf32>
    %48 = vector.broadcast %42 : vector<8x1xf32> to vector<8x64xf32>
    %49 = arith.addf %48, %47 : vector<8x64xf32>
    %50 = vector.extract_strided_slice %6 {offsets = [0, 5], sizes = [8, 1], strides = [1, 1]} : vector<8x6xf32> to vector<8x1xf32>
    %51 = vector.extract_strided_slice %8 {offsets = [0, 5], sizes = [8, 1], strides = [1, 1]} : vector<8x6xf32> to vector<8x1xf32>
    %52 = vector.extract_strided_slice %9 {offsets = [5, 0], sizes = [1, 64], strides = [1, 1]} : vector<6x64xf32> to vector<1x64xf32>
    %53 = vector.broadcast %51 : vector<8x1xf32> to vector<8x64xf32>
    %54 = vector.broadcast %52 : vector<1x64xf32> to vector<8x64xf32>
    %55 = arith.mulf %53, %54 : vector<8x64xf32>
    %56 = vector.broadcast %50 : vector<8x1xf32> to vector<8x64xf32>
    %57 = arith.addf %56, %55 : vector<8x64xf32>
    %58 = arith.mulf %17, %25 : vector<8x64xf32>
    %59 = arith.mulf %33, %41 : vector<8x64xf32>
    %60 = arith.mulf %58, %59 : vector<8x64xf32>
    %61 = arith.mulf %49, %57 : vector<8x64xf32>
    %62 = arith.mulf %60, %61 : vector<8x64xf32>
    %c0_7 = arith.constant 0 : index
    %c0_8 = arith.constant 0 : index
    %63 = vector.load %arg5[%c0_7, %c0_8] : memref<64x128xf32, #tpu.memory_space<vmem>>, vector<64x128xf32>
    %cst_9 = arith.constant dense<0.000000e+00> : vector<8x128xf32>
    %64 = tpu.matmul %62, %63, %cst_9 {dimension_numbers = #tpu.dot_dimension_numbers<[1], [0], [0], [1], [0, 0, 1, 1], [], []>} : vector<8x64xf32>, vector<64x128xf32>, vector<8x128xf32> -> vector<8x128xf32>
    %65 = arith.mulf %64, %64 : vector<8x128xf32>
    %66 = arith.truncf %65 : vector<8x128xf32> to vector<8x128xbf16>
    %c0_10 = arith.constant 0 : index
    %c0_11 = arith.constant 0 : index
    %67 = vector.load %arg6[%c0_10, %c0_11] : memref<128x64xbf16, #tpu.memory_space<vmem>>, vector<128x64xbf16>
    %cst_12 = arith.constant dense<0.000000e+00> : vector<8x64xf32>
    %68 = tpu.matmul %66, %67, %cst_12 {dimension_numbers = #tpu.dot_dimension_numbers<[1], [0], [0], [1], [0, 0, 1, 1], [], []>} : vector<8x128xbf16>, vector<128x64xbf16>, vector<8x64xf32> -> vector<8x64xf32>
    %c0_13 = arith.constant 0 : index
    %c0_14 = arith.constant 0 : index
    %69 = vector.load %arg7[%c0_13, %c0_14] : memref<1x64xf32, #tpu.memory_space<vmem>>, vector<1x64xf32>
    %70 = vector.broadcast %69 : vector<1x64xf32> to vector<8x64xf32>
    %71 = arith.addf %68, %70 : vector<8x64xf32>
    %72 = math.tanh %71 : vector<8x64xf32>
    %73 = arith.truncf %72 : vector<8x64xf32> to vector<8x64xbf16>
    %c0_15 = arith.constant 0 : index
    %c0_16 = arith.constant 0 : index
    %74 = vector.load %arg8[%c0_15, %c0_16] : memref<64x8xbf16, #tpu.memory_space<vmem>>, vector<64x8xbf16>
    %cst_17 = arith.constant dense<0.000000e+00> : vector<8x8xf32>
    %75 = tpu.matmul %73, %74, %cst_17 {dimension_numbers = #tpu.dot_dimension_numbers<[1], [0], [0], [1], [0, 0, 1, 1], [], []>} : vector<8x64xbf16>, vector<64x8xbf16>, vector<8x8xf32> -> vector<8x8xf32>
    %c0_18 = arith.constant 0 : index
    %c0_19 = arith.constant 0 : index
    %76 = vector.load %arg9[%c0_18, %c0_19] : memref<1x8xf32, #tpu.memory_space<vmem>>, vector<1x8xf32>
    %77 = vector.broadcast %76 : vector<1x8xf32> to vector<8x8xf32>
    %78 = arith.addf %75, %77 : vector<8x8xf32>
    %c0_20 = arith.constant 0 : index
    %c0_21 = arith.constant 0 : index
    %79 = vector.load %arg10[%c0_20, %c0_21] : memref<8x8xf32, #tpu.memory_space<vmem>>, vector<8x8xf32>
    tpu.vector_store %arg10[%c0_20, %c0_21], %78 {strides = array<i32>} : memref<8x8xf32, #tpu.memory_space<vmem>>, vector<8x8xf32>,
    return
  }
  func.func @transform_0(%arg0: i32) -> (i32, i32) {
    %c0_i32 = arith.constant 0 : i32
    %c0_i32_0 = arith.constant 0 : i32
    return %arg0, %c0_i32 : i32, i32
  }
  func.func @transform_1(%arg0: i32) -> (i32, i32) {
    %c0_i32 = arith.constant 0 : i32
    %c0_i32_0 = arith.constant 0 : i32
    %c0_i32_1 = arith.constant 0 : i32
    return %c0_i32, %c0_i32_0 : i32, i32
  }
  func.func @transform_2(%arg0: i32) -> (i32, i32) {
    %c0_i32 = arith.constant 0 : i32
    %c0_i32_0 = arith.constant 0 : i32
    %c0_i32_1 = arith.constant 0 : i32
    return %c0_i32, %c0_i32_0 : i32, i32
  }
  func.func @transform_3(%arg0: i32) -> (i32, i32) {
    %c0_i32 = arith.constant 0 : i32
    %c0_i32_0 = arith.constant 0 : i32
    %c0_i32_1 = arith.constant 0 : i32
    return %c0_i32, %c0_i32_0 : i32, i32
  }
  func.func @transform_4(%arg0: i32) -> (i32, i32) {
    %c0_i32 = arith.constant 0 : i32
    %c0_i32_0 = arith.constant 0 : i32
    %c0_i32_1 = arith.constant 0 : i32
    return %c0_i32, %c0_i32_0 : i32, i32
  }
  func.func @transform_5(%arg0: i32) -> (i32, i32) {
    %c0_i32 = arith.constant 0 : i32
    %c0_i32_0 = arith.constant 0 : i32
    %c0_i32_1 = arith.constant 0 : i32
    return %c0_i32, %c0_i32_0 : i32, i32
  }
  func.func @transform_6(%arg0: i32) -> (i32, i32) {
    %c0_i32 = arith.constant 0 : i32
    %c0_i32_0 = arith.constant 0 : i32
    %c0_i32_1 = arith.constant 0 : i32
    return %c0_i32, %c0_i32_0 : i32, i32
  }
  func.func @transform_7(%arg0: i32) -> (i32, i32) {
    %c0_i32 = arith.constant 0 : i32
    %c0_i32_0 = arith.constant 0 : i32
    %c0_i32_1 = arith.constant 0 : i32
    return %c0_i32, %c0_i32_0 : i32, i32
  }
  func.func @transform_8(%arg0: i32) -> (i32, i32) {
    %c0_i32 = arith.constant 0 : i32
    %c0_i32_0 = arith.constant 0 : i32
    %c0_i32_1 = arith.constant 0 : i32
    return %c0_i32, %c0_i32_0 : i32, i32
  }
  func.func @transform_9(%arg0: i32) -> (i32, i32) {
    %c0_i32 = arith.constant 0 : i32
    %c0_i32_0 = arith.constant 0 : i32
    return %arg0, %c0_i32 : i32, i32
  }
}

</mosaic_0001>

<llo_original>
// kernel: tpu_custom_call.1
$region0: #{tpu_custom_call.1}
  #allocation0 [shape = 'u32[]', space=smem, size = 0x4, offset = 0x4, fixed_abs, tag = 'smem constant byte address 0x4 - core index']
  #allocation1 [shape = 'u32[72,128]{1,0:T(1,128)}', space=vmem, size = 0x9000, scoped, tag = 'internal scratch']
  %s0 = inlined_call_operand.vmem [shape: f32[8,3], index: 0, kind: input, shape index: {}]
  %s1 = inlined_call_operand.vmem [shape: f32[3,6], index: 1, kind: input, shape index: {}]
  %s2 = inlined_call_operand.vmem [shape: f32[1,6], index: 2, kind: input, shape index: {}]
  %s3 = inlined_call_operand.vmem [shape: f32[6,64], index: 3, kind: input, shape index: {}]
  %s4 = inlined_call_operand.vmem [shape: f32[64,128], index: 4, kind: input, shape index: {}]
  %s5 = inlined_call_operand.vmem [shape: bf16[128,64], index: 5, kind: input, shape index: {}]
  %s6 = inlined_call_operand.vmem [shape: f32[1,64], index: 6, kind: input, shape index: {}]
  %s7 = inlined_call_operand.vmem [shape: bf16[64,8], index: 7, kind: input, shape index: {}]
  %s8 = inlined_call_operand.vmem [shape: f32[1,8], index: 8, kind: input, shape index: {}]
  %s9 = inlined_call_operand.hbm [shape: f32[8,8], index: 9, kind: output, shape index: {}]
  %s10 = sld [smem:[#allocation0]]
  $region46: #{tpu_custom_call.1} parent=0
    _
  %s12 = ssub.s32 1, %s10
  %s13 = scalar_select 0, %s12, %s10
  $region1: #{tpu_custom_call.1} parent=0
    #allocation2 [shape = 'u8[4096]{0}', space=vmem, size = 0x1000, scoped, tag = 'output window, operand 0, single buffered']
    #allocation3 [shape = 's32[1]{0}', space=sflag, size = 0x4, scoped, tag = 'scoped memory for tpu_custom_call.1']
    %14 = vsyncpa [#allocation3], 0
    // Predicated region
    $region2: #{tpu_custom_call.1} parent=1 // pred_check
      _
    $region3: #{tpu_custom_call.1} parent=1 // pred_check_branch
      %16 = sbr.rel (0) target = $region5
    $region4: #{tpu_custom_call.1} parent=1 // pred_region
      _
    $region5: #{tpu_custom_call.1} parent=1 // pred_fallthru
      _
    // Predicated region
    $region6: #{tpu_custom_call.1} parent=1 // pred_check
      _
    $region7: #{tpu_custom_call.1} parent=1 // pred_check_branch
      %18 = sbr.rel (0) target = $region9
    $region8: #{tpu_custom_call.1} parent=1 // pred_region
      _
    $region9: #{tpu_custom_call.1} parent=1 // pred_fallthru
      _
    // Predicated region
    $region10: #{tpu_custom_call.1} parent=1 // pred_check
      _
    $region11: #{tpu_custom_call.1} parent=1 // pred_check_branch
      %20 = sbr.rel (0) target = $region13
    $region12: #{tpu_custom_call.1} parent=1 // pred_region
      _
    $region13: #{tpu_custom_call.1} parent=1 // pred_fallthru
      _
    // Predicated region
    $region14: #{tpu_custom_call.1} parent=1 // pred_check
      _
    $region15: #{tpu_custom_call.1} parent=1 // pred_check_branch
      %22 = sbr.rel (0) target = $region17
    $region16: #{tpu_custom_call.1} parent=1 // pred_region
      _
    $region17: #{tpu_custom_call.1} parent=1 // pred_fallthru
      _
    // Predicated region
    $region18: #{tpu_custom_call.1} parent=1 // pred_check
      _
    $region19: #{tpu_custom_call.1} parent=1 // pred_check_branch
      %24 = sbr.rel (0) target = $region21
    $region20: #{tpu_custom_call.1} parent=1 // pred_region
      _
    $region21: #{tpu_custom_call.1} parent=1 // pred_fallthru
      _
    // Predicated region
    $region22: #{tpu_custom_call.1} parent=1 // pred_check
      _
    $region23: #{tpu_custom_call.1} parent=1 // pred_check_branch
      %26 = sbr.rel (0) target = $region25
    $region24: #{tpu_custom_call.1} parent=1 // pred_region
      _
    $region25: #{tpu_custom_call.1} parent=1 // pred_fallthru
      _
    // Predicated region
    $region26: #{tpu_custom_call.1} parent=1 // pred_check
      _
    $region27: #{tpu_custom_call.1} parent=1 // pred_check_branch
      %28 = sbr.rel (0) target = $region29
    $region28: #{tpu_custom_call.1} parent=1 // pred_region
      _
    $region29: #{tpu_custom_call.1} parent=1 // pred_fallthru
      _
    // Predicated region
    $region30: #{tpu_custom_call.1} parent=1 // pred_check
      _
    $region31: #{tpu_custom_call.1} parent=1 // pred_check_branch
      %30 = sbr.rel (0) target = $region33
    $region32: #{tpu_custom_call.1} parent=1 // pred_region
      _
    $region33: #{tpu_custom_call.1} parent=1 // pred_fallthru
      _
    // Predicated region
    $region34: #{tpu_custom_call.1} parent=1 // pred_check
      _
    $region35: #{tpu_custom_call.1} parent=1 // pred_check_branch
      %32 = sbr.rel (0) target = $region37
    $region36: #{tpu_custom_call.1} parent=1 // pred_region
      _
    $region37: #{tpu_custom_call.1} parent=1 // pred_fallthru
      _
    %v34 = vld [vmem:[%s0] sm:$0xff]
    %v35 = vld [vmem:[%s1] sm:$0x7]
    %v36 = vld [vmem:[%s2] sm:$0x1]
    %v38 = vperm.slane %v36, 0
    %vm40 = vcmask 23552
    %v42 = vsel %vm40, %v34, 0
    %vm44 = vcmask 1042432
    %v46 = vsel %vm44, %v35, 0
    %48 = vmatpush.msra.mxu0 0.0
    %49 = vmatpush.msra.mxu0 0.0
    %50 = vmatpush.msra.mxu0 0.0
    %51 = vmatpush.msra.mxu0 0.0
    %52 = vmatpush.msra.mxu0 0.0
    %53 = vmatpush.msra.mxu0 0.0
    %54 = vmatpush.msra.mxu0 0.0
    %55 = vmatpush.msra.mxu0 0.0
    %56 = vmatpush.msra.mxu0 0.0
    %57 = vmatpush.msra.mxu0 0.0
    %58 = vmatpush.msra.mxu0 0.0
    %59 = vmatpush.msra.mxu0 0.0
    %60 = vmatpush.msra.mxu0 0.0
    %61 = vmatpush.msra.mxu0 0.0
    %62 = vmatpush.msra.mxu0 0.0
    %63 = vmatpush.msra.mxu0 %v46
    %64 = vmatmul.f32.gmra.mxu0 %v42
    %v65 = vpop.f32.mrf.mxu0
    %v66 = vadd.f32 %v38, %v65
    %67 = vdwg.mxu0
    %v68 = vand.u32 2147483647, %v66
    %vm69 = vcmp.le.f32.partialorder %v68, 0.7853982
    %vm70 = vcmp.lt.s32.totalorder %v66, 0
    %v71 = vand.u32 %v66, 2139095040
    %v72 = vshrl.u32 %v71, 23
    %v73 = vsub.s32 %v72, 127
    %v74 = vand.u32 2147483647, %v66
    %v75 = vand.u32 %v74, 8388607
    %v76 = vor.u32 %v75, 8388608
    %v77 = vsub.s32 0, %v76
    %v78 = vadd.s32 %v73, 1
    %vm79 = vcmp.gt.s32.totalorder %v78, 0
    %v80 = vsel %vm79, %v78, 0
    %v81 = vshrl.u32 %v80, 5
    %v82 = vand.u32 %v80, 31
    %v83 = vsub.s32 32, %v82
    %v84 = vshrl.u32 683565275, %v83
    %v85 = vshll.u32 683565275, %v82
    %v86 = vshrl.u32 2475754826, %v83
    %v87 = vor.u32 %v85, %v86
    %v88 = vshll.u32 2475754826, %v82
    %v89 = vshrl.u32 2131351028, %v83
    %v90 = vor.u32 %v88, %v89
    %v91 = vshll.u32 2131351028, %v82
    %v92 = vshrl.u32 2102212464, %v83
    %v93 = vor.u32 %v91, %v92
    %v94 = vshll.u32 2102212464, %v82
    %v95 = vshrl.u32 920167782, %v83
    %v96 = vor.u32 %v94, %v95
    %v97 = vshll.u32 920167782, %v82
    %v98 = vshrl.u32 1326507024, %v83
    %v99 = vor.u32 %v97, %v98
    %vm100 = vcmp.lt.s32.totalorder %v81, 1
    %vm101 = vcmp.lt.s32.totalorder %v81, 2
    %vm102 = vcmp.lt.s32.totalorder %v81, 3
    %vm103 = vcmp.lt.s32.totalorder %v81, 4
    %v104 = vsel %vm100, %v84, %v87
    %v105 = vsel %vm103, %v93, 2102212464
    %v106 = vsel %vm102, %v90, %v105
    %v107 = vsel %vm101, %v104, %v106
    %v108 = vsel %vm100, %v87, %v90
    %v109 = vsel %vm103, %v96, 920167782
    %v110 = vsel %vm102, %v93, %v109
    %v111 = vsel %vm101, %v108, %v110
    %v112 = vsel %vm100, %v90, %v93
    %v113 = vsel %vm103, %v99, 1326507024
    %v114 = vsel %vm102, %v96, %v113
    %v115 = vsel %vm101, %v112, %v114
    %v116 = vshll.u32 %v76, 8
    %v117 = vand.u32 %v116, 65535
    %v118 = vshrl.u32 %v116, 16
    %v119 = vand.u32 %v115, 65535
    %v120 = vshrl.u32 %v115, 16
    %v121 = vmul.u32 %v117, %v119
    %v122 = vmul.u32 %v117, %v120
    %v123 = vmul.u32 %v118, %v119
    %v124 = vmul.u32 %v118, %v120
    %v125 = vshll.u32 %v122, 16
    %v126 = vshrl.u32 %v122, 16
    %v127 = vshll.u32 %v123, 16
    %v128 = vshrl.u32 %v123, 16
    %vm129 = vc.u32 %v121, %v125
    %v130 = vsel %vm129, 1, 0
    %v131 = vadd.s32 %v121, %v125
    %v132 = vadd.s32 %v124, %v130
    %vm133 = vc.u32 %v131, %v127
    %v134 = vsel %vm133, 1, 0
    %v135 = vadd.s32 %v131, %v127
    %v136 = vadd.s32 %v132, %v134
    %v137 = vadd.s32 %v136, %v126
    %v138 = vadd.s32 %v137, %v128
    %v139 = vand.u32 %v116, 65535
    %v140 = vshrl.u32 %v116, 16
    %v141 = vand.u32 %v111, 65535
    %v142 = vshrl.u32 %v111, 16
    %v143 = vmul.u32 %v139, %v141
    %v144 = vmul.u32 %v139, %v142
    %v145 = vmul.u32 %v140, %v141
    %v146 = vmul.u32 %v140, %v142
    %v147 = vshll.u32 %v144, 16
    %v148 = vshrl.u32 %v144, 16
    %v149 = vshll.u32 %v145, 16
    %v150 = vshrl.u32 %v145, 16
    %vm151 = vc.u32 %v143, %v147
    %v152 = vsel %vm151, 1, 0
    %v153 = vadd.s32 %v143, %v147
    %v154 = vadd.s32 %v146, %v152
    %vm155 = vc.u32 %v153, %v149
    %v156 = vsel %vm155, 1, 0
    %v157 = vadd.s32 %v153, %v149
    %v158 = vadd.s32 %v154, %v156
    %v159 = vadd.s32 %v158, %v148
    %v160 = vadd.s32 %v159, %v150
    %v161 = vmul.u32 %v116, %v107
    %v162 = vadd.s32 %v138, %v157
    %vm163 = vc.u32 %v138, %v157
    %v164 = vadd.s32 %v160, 1
    %v165 = vsel %vm163, %v164, %v160
    %v166 = vadd.s32 %v161, %v165
    %v167 = vadd.s32 %v166, 536870912
    %v168 = vshrl.u32 %v167, 30
    %v169 = vshll.u32 %v168, 30
    %v170 = vsub.s32 %v166, %v169
    %vm171 = vcmp.lt.s32.totalorder %v170, 0
    %v172 = vsub.s32 0, %v170
    %v173 = vsel %vm171, %v172, %v170
    %v174 = vclz %v173
    %v175 = vsub.s32 %v174, 2
    %vm176 = vcmp.gt.s32.totalorder 0, %v175
    %v177 = vsel %vm176, 0, %v175
    %v178 = vsub.s32 32, %v177
    %v179 = vshll.u32 %v170, %v177
    %v180 = vshrl.u32 %v162, %v178
    %v181 = vor.u32 %v179, %v180
    %v182 = vsub.s32 4294967266, %v177
    %v183 = vadd.s32 %v182, 127
    %v184 = vshll.u32 %v183, 23
    %v185 = vor.u32 4788187, %v184
    %v186 = vand.u32 2147483647, %v185
    %v188 = vcvt.s32.f32 %v181
    %v189 = vmul.f32 %v188, %v186
    %v190 = vxor.u32 %v189, 2147483648
    %v191 = vsel %vm70, %v190, %v189
    %v192 = vsub.s32 4, %v168
    %v193 = vsel %vm70, %v192, %v168
    %v194 = vsel %vm69, %v66, %v191
    %v195 = vsel %vm69, 0, %v193
    %v196 = vmul.f32 %v194, %v194
    %v197 = vmul.f32 %v196, -0.001358992
    %v198 = vadd.f32 %v197, 0.041655596
    %v199 = vmul.f32 %v196, %v198
    %v200 = vadd.f32 %v199, -0.4999988
    %v201 = vmul.f32 %v196, %v200
    %v202 = vadd.f32 1.0, %v201
    %v203 = vmul.f32 %v194, %v194
    %v204 = vmul.f32 %v203, -0.00019511016
    %v205 = vadd.f32 %v204, 0.008332121
    %v206 = vmul.f32 %v203, %v205
    %v207 = vadd.f32 %v206, -0.16666654
    %v208 = vmul.f32 %v203, %v207
    %v209 = vadd.f32 %v208, 1.0
    %v210 = vmul.f32 %v209, %v194
    %vm211 = vweird.f32 %v66
    %v212 = vand.u32 %v195, 3
    %vm213 = vcmp.lt.s32.totalorder %v212, 2
    %vm214 = vcmp.eq.s32.totalorder %v212, 0
    %v215 = vxor.u32 %v210, 2147483648
    %v216 = vsel %vm214, %v202, %v215
    %vm217 = vcmp.eq.s32.totalorder %v212, 2
    %v218 = vxor.u32 %v202, 2147483648
    %v219 = vsel %vm217, %v218, %v210
    %v220 = vsel %vm213, %v216, %v219
    %v221 = vsel %vm211, nan, %v220
    %v222 = vand.u32 2147483647, %v66
    %vm223 = vcmp.le.f32.partialorder %v222, 0.7853982
    %vm224 = vcmp.lt.s32.totalorder %v66, 0
    %v225 = vand.u32 %v66, 2139095040
    %v226 = vshrl.u32 %v225, 23
    %v227 = vsub.s32 %v226, 127
    %v228 = vand.u32 2147483647, %v66
    %v229 = vand.u32 %v228, 8388607
    %v230 = vor.u32 %v229, 8388608
    %v231 = vsub.s32 0, %v230
    %v232 = vadd.s32 %v227, 1
    %vm233 = vcmp.gt.s32.totalorder %v232, 0
    %v234 = vsel %vm233, %v232, 0
    %v235 = vshrl.u32 %v234, 5
    %v236 = vand.u32 %v234, 31
    %v237 = vsub.s32 32, %v236
    %v238 = vshrl.u32 683565275, %v237
    %v239 = vshll.u32 683565275, %v236
    %v240 = vshrl.u32 2475754826, %v237
    %v241 = vor.u32 %v239, %v240
    %v242 = vshll.u32 2475754826, %v236
    %v243 = vshrl.u32 2131351028, %v237
    %v244 = vor.u32 %v242, %v243
    %v245 = vshll.u32 2131351028, %v236
    %v246 = vshrl.u32 2102212464, %v237
    %v247 = vor.u32 %v245, %v246
    %v248 = vshll.u32 2102212464, %v236
    %v249 = vshrl.u32 920167782, %v237
    %v250 = vor.u32 %v248, %v249
    %v251 = vshll.u32 920167782, %v236
    %v252 = vshrl.u32 1326507024, %v237
    %v253 = vor.u32 %v251, %v252
    %vm254 = vcmp.lt.s32.totalorder %v235, 1
    %vm255 = vcmp.lt.s32.totalorder %v235, 2
    %vm256 = vcmp.lt.s32.totalorder %v235, 3
    %vm257 = vcmp.lt.s32.totalorder %v235, 4
    %v258 = vsel %vm254, %v238, %v241
    %v259 = vsel %vm257, %v247, 2102212464
    %v260 = vsel %vm256, %v244, %v259
    %v261 = vsel %vm255, %v258, %v260
    %v262 = vsel %vm254, %v241, %v244
    %v263 = vsel %vm257, %v250, 920167782
    %v264 = vsel %vm256, %v247, %v263
    %v265 = vsel %vm255, %v262, %v264
    %v266 = vsel %vm254, %v244, %v247
    %v267 = vsel %vm257, %v253, 1326507024
    %v268 = vsel %vm256, %v250, %v267
    %v269 = vsel %vm255, %v266, %v268
    %v270 = vshll.u32 %v230, 8
    %v271 = vand.u32 %v270, 65535
    %v272 = vshrl.u32 %v270, 16
    %v273 = vand.u32 %v269, 65535
    %v274 = vshrl.u32 %v269, 16
    %v275 = vmul.u32 %v271, %v273
    %v276 = vmul.u32 %v271, %v274
    %v277 = vmul.u32 %v272, %v273
    %v278 = vmul.u32 %v272, %v274
    %v279 = vshll.u32 %v276, 16
    %v280 = vshrl.u32 %v276, 16
    %v281 = vshll.u32 %v277, 16
    %v282 = vshrl.u32 %v277, 16
    %vm283 = vc.u32 %v275, %v279
    %v284 = vsel %vm283, 1, 0
    %v285 = vadd.s32 %v275, %v279
    %v286 = vadd.s32 %v278, %v284
    %vm287 = vc.u32 %v285, %v281
    %v288 = vsel %vm287, 1, 0
    %v289 = vadd.s32 %v285, %v281
    %v290 = vadd.s32 %v286, %v288
    %v291 = vadd.s32 %v290, %v280
    %v292 = vadd.s32 %v291, %v282
    %v293 = vand.u32 %v270, 65535
    %v294 = vshrl.u32 %v270, 16
    %v295 = vand.u32 %v265, 65535
    %v296 = vshrl.u32 %v265, 16
    %v297 = vmul.u32 %v293, %v295
    %v298 = vmul.u32 %v293, %v296
    %v299 = vmul.u32 %v294, %v295
    %v300 = vmul.u32 %v294, %v296
    %v301 = vshll.u32 %v298, 16
    %v302 = vshrl.u32 %v298, 16
    %v303 = vshll.u32 %v299, 16
    %v304 = vshrl.u32 %v299, 16
    %vm305 = vc.u32 %v297, %v301
    %v306 = vsel %vm305, 1, 0
    %v307 = vadd.s32 %v297, %v301
    %v308 = vadd.s32 %v300, %v306
    %vm309 = vc.u32 %v307, %v303
    %v310 = vsel %vm309, 1, 0
    %v311 = vadd.s32 %v307, %v303
    %v312 = vadd.s32 %v308, %v310
    %v313 = vadd.s32 %v312, %v302
    %v314 = vadd.s32 %v313, %v304
    %v315 = vmul.u32 %v270, %v261
    %v316 = vadd.s32 %v292, %v311
    %vm317 = vc.u32 %v292, %v311
    %v318 = vadd.s32 %v314, 1
    %v319 = vsel %vm317, %v318, %v314
    %v320 = vadd.s32 %v315, %v319
    %v321 = vadd.s32 %v320, 536870912
    %v322 = vshrl.u32 %v321, 30
    %v323 = vshll.u32 %v322, 30
    %v324 = vsub.s32 %v320, %v323
    %vm325 = vcmp.lt.s32.totalorder %v324, 0
    %v326 = vsub.s32 0, %v324
    %v327 = vsel %vm325, %v326, %v324
    %v328 = vclz %v327
    %v329 = vsub.s32 %v328, 2
    %vm330 = vcmp.gt.s32.totalorder 0, %v329
    %v331 = vsel %vm330, 0, %v329
    %v332 = vsub.s32 32, %v331
    %v333 = vshll.u32 %v324, %v331
    %v334 = vshrl.u32 %v316, %v332
    %v335 = vor.u32 %v333, %v334
    %v336 = vsub.s32 4294967266, %v331
    %v337 = vadd.s32 %v336, 127
    %v338 = vshll.u32 %v337, 23
    %v339 = vor.u32 4788187, %v338
    %v340 = vand.u32 2147483647, %v339
    %v342 = vcvt.s32.f32 %v335
    %v343 = vmul.f32 %v342, %v340
    %v344 = vxor.u32 %v343, 2147483648
    %v345 = vsel %vm224, %v344, %v343
    %v346 = vsub.s32 4, %v322
    %v347 = vsel %vm224, %v346, %v322
    %v348 = vsel %vm223, %v66, %v345
    %v349 = vsel %vm223, 0, %v347
    %v350 = vmul.f32 %v348, %v348
    %v351 = vmul.f32 %v350, -0.001358992
    %v352 = vadd.f32 %v351, 0.041655596
    %v353 = vmul.f32 %v350, %v352
    %v354 = vadd.f32 %v353, -0.4999988
    %v355 = vmul.f32 %v350, %v354
    %v356 = vadd.f32 1.0, %v355
    %v357 = vmul.f32 %v348, %v348
    %v358 = vmul.f32 %v357, -0.00019511016
    %v359 = vadd.f32 %v358, 0.008332121
    %v360 = vmul.f32 %v357, %v359
    %v361 = vadd.f32 %v360, -0.16666654
    %v362 = vmul.f32 %v357, %v361
    %v363 = vadd.f32 %v362, 1.0
    %v364 = vmul.f32 %v363, %v348
    %vm365 = vweird.f32 %v66
    %v366 = vadd.s32 %v349, 3
    %v367 = vand.u32 %v366, 3
    %vm368 = vcmp.lt.s32.totalorder %v367, 2
    %vm369 = vcmp.eq.s32.totalorder %v367, 0
    %v370 = vxor.u32 %v364, 2147483648
    %v371 = vsel %vm369, %v356, %v370
    %vm372 = vcmp.eq.s32.totalorder %v367, 2
    %v373 = vxor.u32 %v356, 2147483648
    %v374 = vsel %vm372, %v373, %v364
    %v375 = vsel %vm368, %v371, %v374
    %v376 = vsel %vm365, nan, %v375
    %v377 = vsub.f32 %v376, %v221
    %v378 = vld [vmem:[%s3] sm:$0x3f]
    %380 = vset.pattern.permute.xlu0 0
    %381 = vperm.xlu0 %380, %v377
    %v382 = vpop.permute.xlu0 %381
    %v384 = vperm.slane %v378, 0
    %v385 = vmul.f32 %v382, %v384
    %387 = vset.pattern.permute.xlu0 0
    %388 = vperm.xlu0 %387, %v221
    %v389 = vpop.permute.xlu0 %388
    %v391 = vadd.f32 %v389, %v385
    %392 = vset.pattern.permute.xlu0 1
    %393 = vperm.xlu0 %392, %v377
    %v394 = vpop.permute.xlu0 %393
    %v396 = vperm.slane %v378, 1
    %v397 = vmul.f32 %v394, %v396
    %398 = vset.pattern.permute.xlu0 1
    %399 = vperm.xlu0 %398, %v221
    %v400 = vpop.permute.xlu0 %399
    %v402 = vadd.f32 %v400, %v397
    %403 = vset.pattern.permute.xlu0 2
    %404 = vperm.xlu0 %403, %v377
    %v405 = vpop.permute.xlu0 %404
    %v407 = vperm.slane %v378, 2
    %v408 = vmul.f32 %v405, %v407
    %409 = vset.pattern.permute.xlu0 2
    %410 = vperm.xlu0 %409, %v221
    %v411 = vpop.permute.xlu0 %410
    %v413 = vadd.f32 %v411, %v408
    %414 = vset.pattern.permute.xlu0 3
    %415 = vperm.xlu0 %414, %v377
    %v416 = vpop.permute.xlu0 %415
    %v418 = vperm.slane %v378, 3
    %v419 = vmul.f32 %v416, %v418
    %420 = vset.pattern.permute.xlu0 3
    %421 = vperm.xlu0 %420, %v221
    %v422 = vpop.permute.xlu0 %421
    %v424 = vadd.f32 %v422, %v419
    %425 = vset.pattern.permute.xlu0 4
    %426 = vperm.xlu0 %425, %v377
    %v427 = vpop.permute.xlu0 %426
    %v429 = vperm.slane %v378, 4
    %v430 = vmul.f32 %v427, %v429
    %431 = vset.pattern.permute.xlu0 4
    %432 = vperm.xlu0 %431, %v221
    %v433 = vpop.permute.xlu0 %432
    %v435 = vadd.f32 %v433, %v430
    %436 = vset.pattern.permute.xlu0 5
    %437 = vperm.xlu0 %436, %v377
    %v438 = vpop.permute.xlu0 %437
    %v440 = vperm.slane %v378, 5
    %v441 = vmul.f32 %v438, %v440
    %442 = vset.pattern.permute.xlu0 5
    %443 = vperm.xlu0 %442, %v221
    %v444 = vpop.permute.xlu0 %443
    %v446 = vadd.f32 %v444, %v441
    %v447 = vmul.f32 %v391, %v402
    %v448 = vmul.f32 %v413, %v424
    %v449 = vmul.f32 %v447, %v448
    %v450 = vmul.f32 %v435, %v446
    %v451 = vmul.f32 %v449, %v450
    %v452 = vld [vmem:[%s4] sm:$0xff]
    %v453 = vld [vmem:[%s4 + $0x8] sm:$0xff]
    %v454 = vld [vmem:[%s4 + $0x10] sm:$0xff]
    %v455 = vld [vmem:[%s4 + $0x18] sm:$0xff]
    %v456 = vld [vmem:[%s4 + $0x20] sm:$0xff]
    %v457 = vld [vmem:[%s4 + $0x28] sm:$0xff]
    %v458 = vld [vmem:[%s4 + $0x30] sm:$0xff]
    %v459 = vld [vmem:[%s4 + $0x38] sm:$0xff]
    %vm460 = vcmask 523264
    %v462 = vsel %vm460, %v451, 0
    %464 = vmatpush.msra.mxu0 0.0
    %465 = vmatpush.msra.mxu0 0.0
    %466 = vmatpush.msra.mxu0 0.0
    %467 = vmatpush.msra.mxu0 0.0
    %468 = vmatpush.msra.mxu0 0.0
    %469 = vmatpush.msra.mxu0 0.0
    %470 = vmatpush.msra.mxu0 0.0
    %471 = vmatpush.msra.mxu0 0.0
    %472 = vmatpush.msra.mxu0 %v459
    %473 = vmatpush.msra.mxu0 %v458
    %474 = vmatpush.msra.mxu0 %v457
    %475 = vmatpush.msra.mxu0 %v456
    %476 = vmatpush.msra.mxu0 %v455
    %477 = vmatpush.msra.mxu0 %v454
    %478 = vmatpush.msra.mxu0 %v453
    %479 = vmatpush.msra.mxu0 %v452
    %480 = vmatmul.f32.gmra.mxu0 %v462
    %v481 = vpop.f32.mrf.mxu0
    %v482 = vadd.f32 0.0, %v481
    %483 = vdwg.mxu0
    %v484 = vmul.f32 %v482, %v482
    %v485 = vpack.c.bf16 %v484, %v484
    %v486 = vld [vmem:[%s5] sm:$0xf]
    %v487 = vld [vmem:[%s5 + $0x4] sm:$0xf]
    %v488 = vld [vmem:[%s5 + $0x8] sm:$0xf]
    %v489 = vld [vmem:[%s5 + $0xc] sm:$0xf]
    %v490 = vld [vmem:[%s5 + $0x10] sm:$0xf]
    %v491 = vld [vmem:[%s5 + $0x14] sm:$0xf]
    %v492 = vld [vmem:[%s5 + $0x18] sm:$0xf]
    %v493 = vld [vmem:[%s5 + $0x1c] sm:$0xf]
    %v494 = vld [vmem:[%s5 + $0x20] sm:$0xf]
    %v495 = vld [vmem:[%s5 + $0x24] sm:$0xf]
    %v496 = vld [vmem:[%s5 + $0x28] sm:$0xf]
    %v497 = vld [vmem:[%s5 + $0x2c] sm:$0xf]
    %v498 = vld [vmem:[%s5 + $0x30] sm:$0xf]
    %v499 = vld [vmem:[%s5 + $0x34] sm:$0xf]
    %v500 = vld [vmem:[%s5 + $0x38] sm:$0xf]
    %v501 = vld [vmem:[%s5 + $0x3c] sm:$0xf]
    %v502 = vld [vmem:[%s6] sm:$0x1]
    %v504 = vperm.slane %v502, 0
    %v522 = vunpack.c.l.b16 %v486
    %v523 = vunpack.c.l.b16 %v487
    %v524 = vunpack.c.l.b16 %v488
    %v525 = vunpack.c.l.b16 %v489
    %v526 = vunpack.c.l.b16 %v490
    %v527 = vunpack.c.l.b16 %v491
    %v528 = vunpack.c.l.b16 %v492
    %v529 = vunpack.c.l.b16 %v493
    %v530 = vunpack.c.l.b16 %v494
    %v531 = vunpack.c.l.b16 %v495
    %v532 = vunpack.c.l.b16 %v496
    %v533 = vunpack.c.l.b16 %v497
    %v534 = vunpack.c.l.b16 %v498
    %v535 = vunpack.c.l.b16 %v499
    %v536 = vunpack.c.l.b16 %v500
    %v537 = vunpack.c.l.b16 %v501
    %v538 = vpack.c.b16 %v523, %v522
    %v539 = vpack.c.b16 %v525, %v524
    %v540 = vpack.c.b16 %v527, %v526
    %v541 = vpack.c.b16 %v529, %v528
    %v542 = vpack.c.b16 %v531, %v530
    %v543 = vpack.c.b16 %v533, %v532
    %v544 = vpack.c.b16 %v535, %v534
    %v545 = vpack.c.b16 %v537, %v536
    %554 = vmatpush.bf16.msra.mxu0 %v545
    %555 = vmatpush.bf16.msra.mxu0 %v544
    %556 = vmatpush.bf16.msra.mxu0 %v543
    %557 = vmatpush.bf16.msra.mxu0 %v542
    %558 = vmatpush.bf16.msra.mxu0 %v541
    %559 = vmatpush.bf16.msra.mxu0 %v540
    %560 = vmatpush.bf16.msra.mxu0 %v539
    %561 = vmatpush.bf16.msra.mxu0 %v538
    %562 = vmatmul.bf16.gmra.mxu0 %v485
    %v563 = vpop.f32.mrf.mxu0
    %v564 = vadd.f32 %v504, %v563
    %v565 = vpop.f32.mrf.mxu0
    %566 = vdwg.mxu0
    %v567 = vtanh.pop %v564
    %v568 = vpack.c.bf16 %v567, %v567
    %v569 = vld [vmem:[%s7] sm:$0xf]
    %v570 = vld [vmem:[%s7 + $0x4] sm:$0xf]
    %v571 = vld [vmem:[%s7 + $0x8] sm:$0xf]
    %v572 = vld [vmem:[%s7 + $0xc] sm:$0xf]
    %v573 = vld [vmem:[%s7 + $0x10] sm:$0xf]
    %v574 = vld [vmem:[%s7 + $0x14] sm:$0xf]
    %v575 = vld [vmem:[%s7 + $0x18] sm:$0xf]
    %v576 = vld [vmem:[%s7 + $0x1c] sm:$0xf]
    %v577 = vld [vmem:[%s8] sm:$0x1]
    %v579 = vperm.slane %v577, 0
    %v589 = vunpack.c.l.b16 %v569
    %v590 = vunpack.c.l.b16 %v570
    %v591 = vunpack.c.l.b16 %v571
    %v592 = vunpack.c.l.b16 %v572
    %v593 = vunpack.c.l.b16 %v573
    %v594 = vunpack.c.l.b16 %v574
    %v595 = vunpack.c.l.b16 %v575
    %v596 = vunpack.c.l.b16 %v576
    %v597 = vpack.c.b16 %v590, %v589
    %v598 = vpack.c.b16 %v592, %v591
    %v599 = vpack.c.b16 %v594, %v593
    %v600 = vpack.c.b16 %v596, %v595
    %v606 = vsel %vm460, %v568, 0
    %608 = vmatpush.bf16.msra.mxu0 0
    %609 = vmatpush.bf16.msra.mxu0 0
    %610 = vmatpush.bf16.msra.mxu0 0
    %611 = vmatpush.bf16.msra.mxu0 0
    %612 = vmatpush.bf16.msra.mxu0 %v600
    %613 = vmatpush.bf16.msra.mxu0 %v599
    %614 = vmatpush.bf16.msra.mxu0 %v598
    %615 = vmatpush.bf16.msra.mxu0 %v597
    %616 = vmatmul.bf16.gmra.mxu0 %v606
    %v617 = vpop.f32.mrf.mxu0
    %v618 = vadd.f32 %v579, %v617
    %v619 = vpop.f32.mrf.mxu0
    %620 = vdwg.mxu0
    %vm621 = vcmask 64512
    %622 = vst.msk [vmem:[#allocation2] sm:$0xff] %vm621, %v618
    // Predicated region
    $region38: #{tpu_custom_call.1} parent=1 // pred_check
      _
    $region39: #{tpu_custom_call.1} parent=1 // pred_check_branch
      %624 = sbr.rel (0) target = $region41
    $region40: #{tpu_custom_call.1} parent=1 // pred_region
      %626 = vsyncadd [#allocation3], 0
      %s628 = sshll.u32 [#allocation2], 4
      %s629 = int_to_ptr.vmem [resolvable:$true] %s628
      %s630 = sshll.u32 %s9, 4
      %s631 = int_to_ptr.hbm [resolvable:$true] %s630
      %633 = dma.vmem_to_hbm [thread:$0]  %s629, 128, %s631, [#allocation3]
    $region41: #{tpu_custom_call.1} parent=1 // pred_fallthru
      _
    // Predicated region
    $region42: #{tpu_custom_call.1} parent=1 // pred_check
      _
    $region43: #{tpu_custom_call.1} parent=1 // pred_check_branch
      %635 = sbr.rel (0) target = $region45
    $region44: #{tpu_custom_call.1} parent=1 // pred_region
      %637 = dma.done [#allocation3], 128
    $region45: #{tpu_custom_call.1} parent=1 // pred_fallthru
      _
    %638 = vsyncpa [#allocation3], 1

</llo_original>
